<compile_context>
chip_gen: v7x
topology: tpu7x:2x2x1
jax: 0.10.0
libtpu: 0.0.40
codegen_flags: <defaults>
</compile_context>

<pallas_src>
import jax
import jax.numpy as jnp
from jax import lax
from jax.experimental import pallas as pl
from jax.experimental.pallas import tpu as pltpu


def _round_up(n, m):
    return ((n + m - 1) // m) * m


def _device_vmem_bytes():
    try:
        return int(pltpu.get_tpu_info().vmem_capacity_bytes)
    except Exception:
        return 64 * 2**20            # conservative fallback (v7x per-TC VMEM)


def _vmem_limit(needed_bytes, cap):
    return int(min(cap, max(needed_bytes + (8 << 20), 16 << 20)))


def _silu_linear1_kernel(cond_ref, w1_ref, b1_ref, h_ref):
    """Grid (i, k): batch tile i, C-output tile k.  h = SiLU(cond @ W1.T + b1)."""
    dn = (((1,), (1,)), ((), ()))                 # contract the 'in' dim of [out, in] W1
    hh = lax.dot_general(cond_ref[...].astype(w1_ref.dtype), w1_ref[...], dn,
                         preferred_element_type=jnp.float32)
    hh = hh + b1_ref[...]
    h_ref[...] = (hh * jax.nn.sigmoid(hh)).astype(h_ref.dtype)


def _modulation_kernel(x_ref, h_ref, w2s_ref, b2s_ref, w2f_ref, b2f_ref, o_ref):
    """Grid (j, i): output-E tile j (outer, parallel), batch tile i (inner, arbitrary)."""
    dn = (((1,), (1,)), ((), ()))                 # contract the 'in' dim of [out, in] W2
    # NOTE: Mosaic lowers the transposed-RHS contraction natively on the MXU; if a
    # per-tile transpose ever shows up in pl.lower_as_mlir, pre-transpose the W2
    # halves to [C, E] once at parameter-prep time instead of per call.
    h = h_ref[...]
    scale = lax.dot_general(h, w2s_ref[...], dn, preferred_element_type=jnp.float32)
    scale = scale + b2s_ref[...]
    shift = lax.dot_general(h, w2f_ref[...], dn, preferred_element_type=jnp.float32)
    shift = shift + b2f_ref[...]
    x = x_ref[...].astype(jnp.float32)
    o_ref[...] = (x * (1.0 + scale) + shift).astype(o_ref.dtype)


def modulation(x, condition, w1, b1, w2, b2, *,
               single_layer=False, block_b=None, block_e=None, weight_dtype=None):
    """x:[B,E]; condition:[B,C]; w1:[C,C], b1:[C]; w2:[2E,C], b2:[2E]
    (nn.Linear layout: weight is [out, in]).
    weight_dtype=jnp.bfloat16 is the recommended (HBM-roofline) path; matmul
    accumulation stays float32 either way."""
    B, E = x.shape
    Bc, C = condition.shape
    assert Bc == B
    assert w2.shape == (2 * E, C) and b2.shape == (2 * E,)
    if not single_layer:
        assert w1.shape == (C, C) and b1.shape == (C,)

    wdt = jnp.dtype(weight_dtype) if weight_dtype is not None else jnp.dtype(w2.dtype)
    vmem_cap = _device_vmem_bytes()
    budget = int(0.80 * vmem_cap)

    xb = jnp.dtype(x.dtype).itemsize
    cb = jnp.dtype(condition.dtype).itemsize
    wb = wdt.itemsize

    # ---- tile sizes (MXU / sublane / lane friendly) --------------------------
    sub = {4: 8, 2: 16, 1: 32}.get(xb, 8)
    if block_b is None:
        block_b = min(256, _round_up(B, sub))
    block_b = max(sub, _round_up(block_b, sub))
    if block_e is None:
        block_e = 512 if E >= 512 else _round_up(E, 128)
    block_e = max(128, _round_up(block_e, 128))

    C_pad = _round_up(C, 128)                     # lane-dense contraction dim

    def _mod_vmem(bb, be):                        # double-buffered tiles of kernel (2)
        return 2 * (bb * be * xb + bb * C_pad * wb
                    + 2 * be * C_pad * wb + 2 * 8 * be * 4
                    + bb * be * xb)

    # Shrink tiles until they fit the actual device VMEM (matters on v7x: 64 MiB).
    while _mod_vmem(block_b, block_e) > budget and block_e > 128:
        block_e = max(128, (block_e // 2 // 128) * 128)
    while _mod_vmem(block_b, block_e) > budget and block_b > sub:
        block_b = max(sub, _round_up(block_b // 2, sub))

    B_pad = _round_up(B, block_b)
    E_pad = _round_up(E, block_e)
    nb, ne = B_pad // block_b, E_pad // block_e

    # ---- wrapper-side layout plumbing (zero padding, no HBM transposes) ------
    if B_pad != B:
        x = jnp.pad(x, ((0, B_pad - B), (0, 0)))
        condition = jnp.pad(condition, ((0, B_pad - B), (0, 0)))
    if C_pad != C:
        condition = jnp.pad(condition, ((0, 0), (0, C_pad - C)))

    w2c = w2.astype(wdt)
    w2_scale, w2_shift = w2c[:E], w2c[E:]
    b2f = b2.astype(jnp.float32)
    b2_scale, b2_shift = b2f[:E].reshape(1, E), b2f[E:].reshape(1, E)
    if E_pad != E:
        x = jnp.pad(x, ((0, 0), (0, E_pad - E)))
        w2_scale = jnp.pad(w2_scale, ((0, E_pad - E), (0, 0)))
        w2_shift = jnp.pad(w2_shift, ((0, E_pad - E), (0, 0)))
        b2_scale = jnp.pad(b2_scale, ((0, 0), (0, E_pad - E)))
        b2_shift = jnp.pad(b2_shift, ((0, 0), (0, E_pad - E)))
    if C_pad != C:
        w2_scale = jnp.pad(w2_scale, ((0, 0), (0, C_pad - C)))
        w2_shift = jnp.pad(w2_shift, ((0, 0), (0, C_pad - C)))

    # ---- stage 1: h = SiLU(Linear1(condition))  (or SiLU(condition)) ----------
    if single_layer:
        # linear1 == nn.Identity(): a single elementwise SiLU, done in the wrapper.
        h = (condition * jax.nn.sigmoid(condition)).astype(wdt)
    else:
        w1c = w1.astype(wdt)
        b1_2d = b1.astype(jnp.float32).reshape(1, C)
        if C_pad != C:
            w1c = jnp.pad(w1c, ((0, C_pad - C), (0, C_pad - C)))
            b1_2d = jnp.pad(b1_2d, ((0, 0), (0, C_pad - C)))

        block_co = next(bc for bc in (512, 256, 128) if C_pad % bc == 0)

        def _lin1_vmem(bco):
            return 2 * (block_b * C_pad * cb + bco * C_pad * wb
                        + 8 * bco * 4 + block_b * bco * wb)

        while _lin1_vmem(block_co) > budget and block_co > 128:
            block_co //= 2
        nco = C_pad // block_co

        h = pl.pallas_call(
            _silu_linear1_kernel,
            out_shape=jax.ShapeDtypeStruct((B_pad, C_pad), wdt),
            grid_spec=pltpu.PrefetchScalarGridSpec(
                num_scalar_prefetch=0,
                grid=(nb, nco),
                in_specs=[
                    pl.BlockSpec((block_b, C_pad), lambda i, k: (i, 0)),   # condition tile
                    pl.BlockSpec((block_co, C_pad), lambda i, k: (k, 0)),  # W1 row block (streamed)
                    pl.BlockSpec((1, block_co), lambda i, k: (0, k)),      # b1 block
                ],
                out_specs=pl.BlockSpec((block_b, block_co), lambda i, k: (i, k)),
            ),
            compiler_params=pltpu.CompilerParams(
                dimension_semantics=("parallel", "arbitrary"),
                vmem_limit_bytes=_vmem_limit(_lin1_vmem(block_co), vmem_cap)),
            cost_estimate=pl.CostEstimate(
                flops=2 * B_pad * C_pad * C_pad + 5 * B_pad * C_pad,
                transcendentals=B_pad * C_pad,
                bytes_accessed=(B_pad * C_pad * cb + nb * C_pad * C_pad * wb
                                + C_pad * 4 + B_pad * C_pad * wb)),
        )(condition, w1c, b1_2d)

    # ---- stage 2: out = x * (1 + h@W2s.T + b2s) + (h@W2f.T + b2f) ------------
    mod_cost = pl.CostEstimate(
        flops=2 * B_pad * C_pad * (2 * E_pad) + 3 * B_pad * E_pad,
        transcendentals=0,
        bytes_accessed=(B_pad * E_pad * xb                  # x
                        + ne * B_pad * C_pad * wb           # h re-read once per E tile
                        + 2 * E_pad * C_pad * wb            # W2 halves (read once; resident per j)
                        + 2 * E_pad * 4                     # b2 halves
                        + B_pad * E_pad * xb))              # out

    out = pl.pallas_call(
        _modulation_kernel,
        out_shape=jax.ShapeDtypeStruct((B_pad, E_pad), x.dtype),
        grid_spec=pltpu.PrefetchScalarGridSpec(
            num_scalar_prefetch=0,
            grid=(ne, nb),                                   # E tiles OUTER (parallel), batch INNER
            in_specs=[
                pl.BlockSpec((block_b, block_e), lambda j, i: (i, j)),   # x tile
                pl.BlockSpec((block_b, C_pad), lambda j, i: (i, 0)),     # h tile (wdt)
                pl.BlockSpec((block_e, C_pad), lambda j, i: (j, 0)),     # W2 scale rows (resident per j)
                pl.BlockSpec((1, block_e), lambda j, i: (0, j)),         # b2 scale
                pl.BlockSpec((block_e, C_pad), lambda j, i: (j, 0)),     # W2 shift rows (resident per j)
                pl.BlockSpec((1, block_e), lambda j, i: (0, j)),         # b2 shift
            ],
            out_specs=pl.BlockSpec((block_b, block_e), lambda j, i: (i, j)),
        ),
        compiler_params=pltpu.CompilerParams(
            dimension_semantics=("parallel", "arbitrary"),
            vmem_limit_bytes=_vmem_limit(_mod_vmem(block_b, block_e), vmem_cap)),
        cost_estimate=mod_cost,
    )(x, h, w2_scale, b2_scale, w2_shift, b2_shift)

    return out[:B, :E]


def modulation_ref(x, condition, w1, b1, w2, b2, *, single_layer=False, weight_dtype=None):
    wdt = weight_dtype if weight_dtype is not None else w2.dtype
    if single_layer:
        h = condition * jax.nn.sigmoid(condition)
    else:
        h = jnp.dot(condition.astype(wdt), w1.astype(wdt).T,
                    preferred_element_type=jnp.float32) + b1
        h = h * jax.nn.sigmoid(h)
    emb = jnp.dot(h.astype(wdt), w2.astype(wdt).T,
                  preferred_element_type=jnp.float32) + b2
    e = x.shape[-1]
    scale, shift = emb[:, :e], emb[:, e:]
    return (x.astype(jnp.float32) * (1.0 + scale) + shift).astype(x.dtype)


if __name__ == "__main__":
    # Small shapes; intentionally not tile-aligned to exercise B / E / C padding.
    B = 10             # batch
    E = 192            # embedding_dim (feature dim of x)
    C = 48             # condition_dim

    key = jax.random.PRNGKey(0)
    kx, kc, kw1, kb1, kw2, kb2 = jax.random.split(key, 6)

    x = jax.random.normal(kx, (B, E), dtype=jnp.float32)
    condition = jax.random.normal(kc, (B, C), dtype=jnp.float32)

    # nn.Linear layout: weight [out, in], bias [out].
    w1 = jax.random.normal(kw1, (C, C), dtype=jnp.float32) * 0.1
    b1 = jax.random.normal(kb1, (C,), dtype=jnp.float32) * 0.1
    w2 = jax.random.normal(kw2, (2 * E, C), dtype=jnp.float32) * 0.1
    b2 = jax.random.normal(kb2, (2 * E,), dtype=jnp.float32) * 0.1

    # f32 path with an explicit multi-tile grid (2 E tiles x 2 batch tiles).
    out = modulation(x, condition, w1, b1, w2, b2, block_b=8, block_e=128)
    out = jax.block_until_ready(out)
    ref = modulation_ref(x, condition, w1, b1, w2, b2)
    assert out.shape == (B, E)
    assert jnp.allclose(out, ref, atol=1e-4, rtol=1e-4), "f32 mismatch vs reference"

    # bf16-weight path (recommended: halves weight HBM/VMEM traffic), default tiles.
    out_bf16 = modulation(x, condition, w1, b1, w2, b2, weight_dtype=jnp.bfloat16)
    out_bf16 = jax.block_until_ready(out_bf16)
    ref_bf16 = modulation_ref(x, condition, w1, b1, w2, b2, weight_dtype=jnp.bfloat16)
    assert jnp.allclose(out_bf16, ref_bf16, atol=5e-2, rtol=5e-2), "bf16 mismatch vs reference"

    # single_layer=True (linear1 = nn.Identity): h = SiLU(condition), then Linear2.
    out_sl = modulation(x, condition, None, None, w2, b2, single_layer=True)
    out_sl = jax.block_until_ready(out_sl)
    ref_sl = modulation_ref(x, condition, None, None, w2, b2, single_layer=True)
    assert jnp.allclose(out_sl, ref_sl, atol=1e-4, rtol=1e-4), "single_layer mismatch vs reference"

    print("KERNEL_OK")
</pallas_src>

<mosaic_0001>
module attributes {stable_mosaic.version = 11 : i64} {
  func.func @_silu_linear1_kernel(%arg0: i32, %arg1: i32, %arg2: memref<8x128xf32, #tpu.memory_space<vmem>>, %arg3: memref<128x128xf32, #tpu.memory_space<vmem>>, %arg4: memref<1x128xf32, #tpu.memory_space<vmem>>, %arg5: memref<8x128xf32, #tpu.memory_space<vmem>>) attributes {dimension_semantics = [#tpu.dimension_semantics<parallel>, #tpu.dimension_semantics<arbitrary>], iteration_bounds = array<i64: 2, 1>, scalar_prefetch = 0 : i64, scratch_operands = 0 : i64, tpu.core_type = #tpu.core_type<tc>, window_params = [{transform_indices = @transform_0, window_bounds = array<i64: 8, 128>}, {transform_indices = @transform_1, window_bounds = array<i64: 128, 128>}, {transform_indices = @transform_2, window_bounds = array<i64: 1, 128>}, {transform_indices = @transform_3, window_bounds = array<i64: 8, 128>}]} {
    %c0 = arith.constant 0 : index
    %c0_0 = arith.constant 0 : index
    %0 = vector.load %arg2[%c0, %c0_0] : memref<8x128xf32, #tpu.memory_space<vmem>>, vector<8x128xf32>
    %c0_1 = arith.constant 0 : index
    %c0_2 = arith.constant 0 : index
    %1 = vector.load %arg3[%c0_1, %c0_2] : memref<128x128xf32, #tpu.memory_space<vmem>>, vector<128x128xf32>
    %cst = arith.constant dense<0.000000e+00> : vector<8x128xf32>
    %2 = tpu.matmul %0, %1, %cst {dimension_numbers = #tpu.dot_dimension_numbers<[1], [1], [0], [0], [0, 0, 1, 0], [], []>} : vector<8x128xf32>, vector<128x128xf32>, vector<8x128xf32> -> vector<8x128xf32>
    %c0_3 = arith.constant 0 : index
    %c0_4 = arith.constant 0 : index
    %3 = vector.load %arg4[%c0_3, %c0_4] : memref<1x128xf32, #tpu.memory_space<vmem>>, vector<1x128xf32>
    %4 = vector.broadcast %3 : vector<1x128xf32> to vector<8x128xf32>
    %5 = arith.addf %2, %4 : vector<8x128xf32>
    %6 = arith.negf %5 : vector<8x128xf32>
    %7 = math.exp %6 : vector<8x128xf32>
    %cst_5 = arith.constant 1.000000e+00 : f32
    %8 = vector.broadcast %cst_5 : f32 to vector<8x128xf32>
    %9 = arith.addf %8, %7 : vector<8x128xf32>
    %10 = arith.divf %8, %9 : vector<8x128xf32>
    %11 = arith.mulf %5, %10 : vector<8x128xf32>
    %c0_6 = arith.constant 0 : index
    %c0_7 = arith.constant 0 : index
    %12 = vector.load %arg5[%c0_6, %c0_7] : memref<8x128xf32, #tpu.memory_space<vmem>>, vector<8x128xf32>
    tpu.vector_store %arg5[%c0_6, %c0_7], %11 {strides = array<i32>} : memref<8x128xf32, #tpu.memory_space<vmem>>, vector<8x128xf32>,
    return
  }
  func.func @transform_0(%arg0: i32, %arg1: i32) -> (i32, i32) {
    %c0_i32 = arith.constant 0 : i32
    %c0_i32_0 = arith.constant 0 : i32
    return %arg0, %c0_i32 : i32, i32
  }
  func.func @transform_1(%arg0: i32, %arg1: i32) -> (i32, i32) {
    %c0_i32 = arith.constant 0 : i32
    %c0_i32_0 = arith.constant 0 : i32
    return %arg1, %c0_i32 : i32, i32
  }
  func.func @transform_2(%arg0: i32, %arg1: i32) -> (i32, i32) {
    %c0_i32 = arith.constant 0 : i32
    %c0_i32_0 = arith.constant 0 : i32
    return %c0_i32, %arg1 : i32, i32
  }
  func.func @transform_3(%arg0: i32, %arg1: i32) -> (i32, i32) {
    %c0_i32 = arith.constant 0 : i32
    return %arg0, %arg1 : i32, i32
  }
}

</mosaic_0001>

<llo_original>
// kernel: tpu_custom_call.1
$region0: #{tpu_custom_call.1}
  #allocation0 [shape = 'u32[]', space=smem, size = 0x4, offset = 0x4, fixed_abs, tag = 'smem constant byte address 0x4 - core index']
  #allocation1 [shape = 'u32[144,128]{1,0:T(1,128)}', space=vmem, size = 0x12000, scoped, tag = 'internal scratch']
  %s0 = inlined_call_operand.hbm [shape: f32[16,128], index: 0, kind: input, shape index: {}]
  %s1 = inlined_call_operand.hbm [shape: f32[128,128], index: 1, kind: input, shape index: {}]
  %s2 = inlined_call_operand.vmem [shape: f32[1,128], index: 2, kind: input, shape index: {}]
  %s3 = inlined_call_operand.hbm [shape: f32[16,128], index: 3, kind: output, shape index: {}]
  %s4 = sld [smem:[#allocation0]]
  $region53: #{tpu_custom_call.1} parent=0
    _
  %s6 = ssub.s32 1, %s4
  %s7 = scalar_select 0, %s6, %s4
  $region1: #{tpu_custom_call.1} parent=0
    #allocation2 [shape = 'u8[8192]{0}', space=vmem, size = 0x2000, scoped, tag = 'input window, operand 0']
    #allocation3 [shape = 's32[2]{0}', space=sflag, size = 0x8, scoped, tag = 'scoped memory for tpu_custom_call.1']
    #allocation4 [shape = 's32[2]{0}', space=sflag, size = 0x8, scoped, tag = 'scoped memory for tpu_custom_call.1']
    #allocation5 [shape = 'u8[65536]{0}', space=vmem, size = 0x10000, scoped, tag = 'input window, operand 1, single buffered']
    #allocation6 [shape = 's32[1]{0}', space=sflag, size = 0x4, scoped, tag = 'scoped memory for tpu_custom_call.1']
    #allocation7 [shape = 'u8[8192]{0}', space=vmem, size = 0x2000, scoped, tag = 'output window, operand 0']
    %8 = vsyncpa [#allocation3], 0
    %s9 = scalar_lea.sflag [#allocation3], 1
    %10 = vsyncpa %s9, 0
    %11 = vsyncpa [#allocation6], 0
    %12 = vsyncpa [#allocation4], 0
    %s13 = scalar_lea.sflag [#allocation4], 1
    %14 = vsyncpa %s13, 0
    loop: start=0, step=1, limit=4
    $region2: #{tpu_custom_call.1} parent=1 // loop_pre_header
      _
    $region3: #{tpu_custom_call.1} parent=1 // loop_header
      %s16 = sphi 0, %s20
      %p17 = scmp.ge.s32.totalorder %s16, 4
      %s23 = sphi 0, %s35
      %s24 = sphi 0, %s31
      %s25 = sphi 0, %s23
      %s26 = sphi 0, %s24
      %s27 = sphi 0, %s25
      %s28 = sphi 0, %s26
      %s38 = sphi 0, %s40
      %s41 = sphi 0, %s38
      %s42 = sphi 0, %s41
      %s58 = sphi 0, %s42
      %s64 = sphi 0, %s66
      %s67 = sphi 0, %s64
      %s68 = sphi 0, %s67
      %s84 = sphi 0, %s68
      %s90 = sphi 0, %s92
      %s93 = sphi 0, %s90
      %s94 = sphi 0, %s93
      %s110 = sphi 0, %s94
      %s118 = sphi 0, %s120
      %s121 = sphi 0, %s118
      %s122 = sphi 0, %s121
      %s138 = sphi 0, %s122
    $region4: #{tpu_custom_call.1} parent=1 // loop_header_branch
      %19 = sbr.rel (%p17) target = $region8
    $region5: #{tpu_custom_call.1} parent=1 // loop_body
      %s21 = ssub.s32 %s16, 1
      %s22 = ssub.s32 %s16, 2
      %s29 = sadd.s32 1, %s24
      %p30 = scmp.ge.s32.totalorder %s29, 1
      %s31 = scalar_select %p30, 0, %s29
      %s32 = sadd.s32 1, %s23
      %s33 = scalar_select %p30, %s32, %s23
      %p34 = scmp.ge.s32.totalorder %s33, 2
      %s35 = scalar_select %p34, 0, %s33
      %s36 = ssub.s32 %s23, %s35
      %p37 = scmp.eq.s32.totalorder %s36, 0
      %s39 = sadd.s32 %s38, 1
      %s40 = scalar_select %p37, %s38, %s39
      %p43 = pneg %p37
      %p44 = scmp.eq.s32.totalorder %s16, 1
      %p45 = por %p43, %p44
      %p46 = scmp.ne.s32.totalorder %s38, %s41
      %p47 = scmp.eq.s32.totalorder %s16, 0
      %p48 = por %p46, %p47
      %p49 = scmp.ne.s32.totalorder %s38, %s41
      %p50 = scmp.eq.s32.totalorder %s21, 1
      %p51 = por %p49, %p50
      %p52 = scmp.ne.s32.totalorder %s41, %s42
      %p53 = scmp.eq.s32.totalorder %s21, 0
      %p54 = por %p52, %p53
      %p55 = scmp.ne.s32.totalorder %s41, %s42
      %p56 = scmp.eq.s32.totalorder %s22, 1
      %p57 = por %p55, %p56
      %p59 = scmp.ne.s32.totalorder %s42, %s58
      %p60 = scmp.eq.s32.totalorder %s22, 0
      %p61 = por %p59, %p60
      %s62 = ssub.s32 %s24, %s31
      %p63 = scmp.eq.s32.totalorder %s62, 0
      %s65 = sadd.s32 %s64, 1
      %s66 = scalar_select %p63, %s64, %s65
      %p69 = pneg %p63
      %p70 = scmp.eq.s32.totalorder %s16, 1
      %p71 = por %p69, %p70
      %p72 = scmp.ne.s32.totalorder %s64, %s67
      %p73 = scmp.eq.s32.totalorder %s16, 0
      %p74 = por %p72, %p73
      %p75 = scmp.ne.s32.totalorder %s64, %s67
      %p76 = scmp.eq.s32.totalorder %s21, 1
      %p77 = por %p75, %p76
      %p78 = scmp.ne.s32.totalorder %s67, %s68
      %p79 = scmp.eq.s32.totalorder %s21, 0
      %p80 = por %p78, %p79
      %p81 = scmp.ne.s32.totalorder %s67, %s68
      %p82 = scmp.eq.s32.totalorder %s22, 1
      %p83 = por %p81, %p82
      %p85 = scmp.ne.s32.totalorder %s68, %s84
      %p86 = scmp.eq.s32.totalorder %s22, 0
      %p87 = por %p85, %p86
      %s88 = ssub.s32 %s24, %s31
      %p89 = scmp.eq.s32.totalorder %s88, 0
      %s91 = sadd.s32 %s90, 1
      %s92 = scalar_select %p89, %s90, %s91
      %p95 = pneg %p89
      %p96 = scmp.eq.s32.totalorder %s16, 1
      %p97 = por %p95, %p96
      %p98 = scmp.ne.s32.totalorder %s90, %s93
      %p99 = scmp.eq.s32.totalorder %s16, 0
      %p100 = por %p98, %p99
      %p101 = scmp.ne.s32.totalorder %s90, %s93
      %p102 = scmp.eq.s32.totalorder %s21, 1
      %p103 = por %p101, %p102
      %p104 = scmp.ne.s32.totalorder %s93, %s94
      %p105 = scmp.eq.s32.totalorder %s21, 0
      %p106 = por %p104, %p105
      %p107 = scmp.ne.s32.totalorder %s93, %s94
      %p108 = scmp.eq.s32.totalorder %s22, 1
      %p109 = por %p107, %p108
      %p111 = scmp.ne.s32.totalorder %s94, %s110
      %p112 = scmp.eq.s32.totalorder %s22, 0
      %p113 = por %p111, %p112
      %s114 = ssub.s32 %s23, %s35
      %s115 = ssub.s32 %s24, %s31
      %s116 = sor.u32 %s114, %s115
      %p117 = scmp.eq.s32.totalorder %s116, 0
      %s119 = sadd.s32 %s118, 1
      %s120 = scalar_select %p117, %s118, %s119
      %p123 = pneg %p117
      %p124 = scmp.eq.s32.totalorder %s16, 1
      %p125 = por %p123, %p124
      %p126 = scmp.ne.s32.totalorder %s118, %s121
      %p127 = scmp.eq.s32.totalorder %s16, 0
      %p128 = por %p126, %p127
      %p129 = scmp.ne.s32.totalorder %s118, %s121
      %p130 = scmp.eq.s32.totalorder %s21, 1
      %p131 = por %p129, %p130
      %p132 = scmp.ne.s32.totalorder %s121, %s122
      %p133 = scmp.eq.s32.totalorder %s21, 0
      %p134 = por %p132, %p133
      %p135 = scmp.ne.s32.totalorder %s121, %s122
      %p136 = scmp.eq.s32.totalorder %s22, 1
      %p137 = por %p135, %p136
      %p139 = scmp.ne.s32.totalorder %s122, %s138
      %p140 = scmp.eq.s32.totalorder %s22, 0
      %p141 = por %p139, %p140
      %p142 = scmp.le.s32.totalorder 1, %s16
      %p143 = scmp.lt.s32.totalorder %s16, 3
      %p144 = pnand %p142, %p143
      %p145 = pneg %p144
      // Predicated region
      $region9: #{tpu_custom_call.1} parent=5 // pred_check
        _
      $region10: #{tpu_custom_call.1} parent=5 // pred_check_branch
        %147 = sbr.rel (%p144) target = $region12
      $region11: #{tpu_custom_call.1} parent=5 // pred_region
        %s148 = ssub.s32 %s16, 1
        // Predicated region
        $region13: #{tpu_custom_call.1} parent=11 // pred_check
          %p149 = pneg %p80
        $region14: #{tpu_custom_call.1} parent=11 // pred_check_branch
          %151 = sbr.rel (%p149) target = $region16
        $region15: #{tpu_custom_call.1} parent=11 // pred_region
          %s152 = smul.u32 16, %s26
          %s154 = ssub.s32 2048, 2048
          %155 = vsyncadd [#allocation6], %s154
          %s156 = smul.addr %s152, 128
          %s157 = scalar_lea.hbm %s1, %s156
          %s158 = sshll.u32 [#allocation5], 4
          %s159 = int_to_ptr.vmem [resolvable:$true] %s158
          %164 = dma.hbm_to_vmem [thread:$0]  %s157, 2048, %s159, [#allocation6], 128, 128, 8
        $region16: #{tpu_custom_call.1} parent=11 // pred_fallthru
          _
        // Predicated region
        $region17: #{tpu_custom_call.1} parent=11 // pred_check
          %p165 = pneg %p106
        $region18: #{tpu_custom_call.1} parent=11 // pred_check_branch
          %167 = sbr.rel (%p165) target = $region20
        $region19: #{tpu_custom_call.1} parent=11 // pred_region
          %p168 = scmp.lt.s32.totalorder %s26, 0
          %s169 = scalar_select %p168, %s26, 0
          %s170 = scalar_lea.vmem %s2, %s169
        $region20: #{tpu_custom_call.1} parent=11 // pred_fallthru
          _
      $region12: #{tpu_custom_call.1} parent=5 // pred_fallthru
        _
      %p171 = scmp.lt.s32.totalorder %s16, 2
      // Predicated region
      $region21: #{tpu_custom_call.1} parent=5 // pred_check
        %p172 = pneg %p171
      $region22: #{tpu_custom_call.1} parent=5 // pred_check_branch
        %174 = sbr.rel (%p172) target = $region24
      $region23: #{tpu_custom_call.1} parent=5 // pred_region
        // Predicated region
        $region25: #{tpu_custom_call.1} parent=23 // pred_check
          %p175 = pneg %p48
        $region26: #{tpu_custom_call.1} parent=23 // pred_check_branch
          %177 = sbr.rel (%p175) target = $region28
        $region27: #{tpu_custom_call.1} parent=23 // pred_region
          %s178 = sand.u32 %s38, 1
          %s179 = scalar_lea.sflag [#allocation3], %s178
          %s180 = sand.u32 %s38, 1
          %s181 = smul.addr %s180, 8
          %s182 = scalar_lea.vmem [#allocation2], %s181
          %s184 = ssub.s32 128, 128
          %185 = vsyncadd %s179, %s184
          %s186 = smul.addr %s23, 128
          %s187 = scalar_lea.hbm %s0, %s186
          %s189 = sshll.u32 %s182, 4
          %s190 = int_to_ptr.vmem [resolvable:$true] %s189
          %192 = dma.hbm_to_vmem [thread:$0]  %s187, 128, %s190, %s179
        $region28: #{tpu_custom_call.1} parent=23 // pred_fallthru
          _
      $region24: #{tpu_custom_call.1} parent=5 // pred_fallthru
        _
      %p193 = scmp.le.s32.totalorder 1, %s16
      %p194 = scmp.lt.s32.totalorder %s16, 3
      %p195 = pnand %p193, %p194
      %p196 = pneg %p195
      // Predicated region
      $region29: #{tpu_custom_call.1} parent=5 // pred_check
        _
      $region30: #{tpu_custom_call.1} parent=5 // pred_check_branch
        %198 = sbr.rel (%p195) target = $region32
      $region31: #{tpu_custom_call.1} parent=5 // pred_region
        %s199 = ssub.s32 %s16, 1
        %s200 = sand.u32 %s41, 1
        %s201 = scalar_lea.sflag [#allocation3], %s200
        %s202 = sand.u32 %s41, 1
        %s203 = smul.addr %s202, 8
        %s204 = scalar_lea.vmem [#allocation2], %s203
        // Predicated region
        $region33: #{tpu_custom_call.1} parent=31 // pred_check
          %p205 = pneg %p54
        $region34: #{tpu_custom_call.1} parent=31 // pred_check_branch
          %207 = sbr.rel (%p205) target = $region36
        $region35: #{tpu_custom_call.1} parent=31 // pred_region
          %208 = dma.done %s201, 128
        $region36: #{tpu_custom_call.1} parent=31 // pred_fallthru
          _
        // Predicated region
        $region37: #{tpu_custom_call.1} parent=31 // pred_check
          %p209 = pneg %p80
        $region38: #{tpu_custom_call.1} parent=31 // pred_check_branch
          %211 = sbr.rel (%p209) target = $region40
        $region39: #{tpu_custom_call.1} parent=31 // pred_region
          %212 = dma.done [#allocation6], 2048
        $region40: #{tpu_custom_call.1} parent=31 // pred_fallthru
          _
        %s213 = sand.u32 %s41, 1
        %s214 = scalar_lea.sflag [#allocation3], %s213
        %s215 = sand.u32 %s41, 1
        %s216 = smul.addr %s215, 8
        %s217 = scalar_lea.vmem [#allocation2], %s216
        %p218 = pneg %p54
        %p219 = pneg %p51
        %p220 = pneg %p80
        %p221 = pneg %p77
        %p222 = scmp.lt.s32.totalorder %s26, 0
        %s223 = scalar_select %p222, %s26, 0
        %s224 = scalar_lea.vmem %s2, %s223
        %p225 = pneg %p106
        %p226 = pneg %p103
        %p227 = pneg %p134
        %p228 = pneg %p131
        %s229 = sand.u32 %s121, 1
        %s230 = scalar_lea.sflag [#allocation4], %s229
        %s231 = sand.u32 %s121, 1
        %s232 = smul.addr %s231, 8
        %s233 = scalar_lea.vmem [#allocation7], %s232
        %s234 = smul.u32 16, %s26
        %p235 = scmp.lt.s32.totalorder %s26, 0
        %s236 = scalar_select %p235, %s26, 0
        %s237 = scalar_lea.vmem %s2, %s236
        %v238 = vld [vmem:[%s204] sm:$0xff]
        %v239 = vld [vmem:[#allocation5] sm:$0xff]
        %v240 = vld [vmem:[#allocation5 + $0x8] sm:$0xff]
        %v241 = vld [vmem:[#allocation5 + $0x10] sm:$0xff]
        %v242 = vld [vmem:[#allocation5 + $0x18] sm:$0xff]
        %v243 = vld [vmem:[#allocation5 + $0x20] sm:$0xff]
        %v244 = vld [vmem:[#allocation5 + $0x28] sm:$0xff]
        %v245 = vld [vmem:[#allocation5 + $0x30] sm:$0xff]
        %v246 = vld [vmem:[#allocation5 + $0x38] sm:$0xff]
        %v247 = vld [vmem:[#allocation5 + $0x40] sm:$0xff]
        %v248 = vld [vmem:[#allocation5 + $0x48] sm:$0xff]
        %v249 = vld [vmem:[#allocation5 + $0x50] sm:$0xff]
        %v250 = vld [vmem:[#allocation5 + $0x58] sm:$0xff]
        %v251 = vld [vmem:[#allocation5 + $0x60] sm:$0xff]
        %v252 = vld [vmem:[#allocation5 + $0x68] sm:$0xff]
        %v253 = vld [vmem:[#allocation5 + $0x70] sm:$0xff]
        %v254 = vld [vmem:[#allocation5 + $0x78] sm:$0xff]
        %v255 = vld [vmem:[%s237] sm:$0x1]
        %v257 = vlaneseq
        %v258 = vshrl.u32 %v257, 7
        %v259 = vsub.s32 0, %v258
        %v260 = vrot.slane %v255, %v259
        %262 = vmatprep.subr.mxu0 0.0
        %263 = vmatpush1.xpose.msra.mxu0 %v239
        %264 = vmatprep.subr.mxu0 0.0
        %265 = vmatpush1.xpose.msra.mxu0 %v240
        %266 = vmatprep.subr.mxu0 0.0
        %267 = vmatpush1.xpose.msra.mxu0 %v241
        %268 = vmatprep.subr.mxu0 0.0
        %269 = vmatpush1.xpose.msra.mxu0 %v242
        %270 = vmatprep.subr.mxu0 0.0
        %271 = vmatpush1.xpose.msra.mxu0 %v243
        %272 = vmatprep.subr.mxu0 0.0
        %273 = vmatpush1.xpose.msra.mxu0 %v244
        %274 = vmatprep.subr.mxu0 0.0
        %275 = vmatpush1.xpose.msra.mxu0 %v245
        %276 = vmatprep.subr.mxu0 0.0
        %277 = vmatpush1.xpose.msra.mxu0 %v246
        %278 = vmatprep.subr.mxu0 0.0
        %279 = vmatpush1.xpose.msra.mxu0 %v247
        %280 = vmatprep.subr.mxu0 0.0
        %281 = vmatpush1.xpose.msra.mxu0 %v248
        %282 = vmatprep.subr.mxu0 0.0
        %283 = vmatpush1.xpose.msra.mxu0 %v249
        %284 = vmatprep.subr.mxu0 0.0
        %285 = vmatpush1.xpose.msra.mxu0 %v250
        %286 = vmatprep.subr.mxu0 0.0
        %287 = vmatpush1.xpose.msra.mxu0 %v251
        %288 = vmatprep.subr.mxu0 0.0
        %289 = vmatpush1.xpose.msra.mxu0 %v252
        %290 = vmatprep.subr.mxu0 0.0
        %291 = vmatpush1.xpose.msra.mxu0 %v253
        %292 = vmatprep.subr.mxu0 0.0
        %293 = vmatpush1.xpose.msra.mxu0 %v254
        %294 = vmatprep.subr.mxu0 0.0
        %295 = vmatpush1.xpose.msra.mxu0 0.0
        %296 = vmatprep.subr.mxu0 0.0
        %297 = vmatpush1.xpose.msra.mxu0 0.0
        %298 = vmatprep.subr.mxu0 0.0
        %299 = vmatpush1.xpose.msra.mxu0 0.0
        %300 = vmatprep.subr.mxu0 0.0
        %301 = vmatpush1.xpose.msra.mxu0 0.0
        %302 = vmatprep.subr.mxu0 0.0
        %303 = vmatpush1.xpose.msra.mxu0 0.0
        %304 = vmatprep.subr.mxu0 0.0
        %305 = vmatpush1.xpose.msra.mxu0 0.0
        %306 = vmatprep.subr.mxu0 0.0
        %307 = vmatpush1.xpose.msra.mxu0 0.0
        %308 = vmatprep.subr.mxu0 0.0
        %309 = vmatpush1.xpose.msra.mxu0 0.0
        %310 = vmatprep.subr.mxu0 0.0
        %311 = vmatpush1.xpose.msra.mxu0 0.0
        %312 = vmatprep.subr.mxu0 0.0
        %313 = vmatpush1.xpose.msra.mxu0 0.0
        %314 = vmatprep.subr.mxu0 0.0
        %315 = vmatpush1.xpose.msra.mxu0 0.0
        %316 = vmatprep.subr.mxu0 0.0
        %317 = vmatpush1.xpose.msra.mxu0 0.0
        %318 = vmatprep.subr.mxu0 0.0
        %319 = vmatpush1.xpose.msra.mxu0 0.0
        %320 = vmatprep.subr.mxu0 0.0
        %321 = vmatpush1.xpose.msra.mxu0 0.0
        %322 = vmatprep.subr.mxu0 0.0
        %323 = vmatpush1.xpose.msra.mxu0 0.0
        %324 = vmatprep.subr.mxu0 0.0
        %325 = vmatpush1.xpose.msra.mxu0 0.0
        %326 = vmatprep.mubr.f32.mxu0 0.0
        %327 = vmatmul.mubr.f32.gmra.mrb[0].mxu0 %v238
        %v328 = vpop.f32.mrb[0].mxu0
        %v329 = vadd.f32 %v260, %v328
        %v330 = vpop.f32.mrb[0].mxu0
        %331 = vdwg.mxu0
        %v332 = vxor.u32 %v329, 2147483648
        %v333 = vmul.f32 %v332, 1.442695
        %v334 = vpow.pop %v333
        %v335 = vadd.f32 %v334, 1.0
        %v336 = vrcp.pop %v335
        %v337 = vmul.f32 1.0, %v336
        %v338 = vmul.f32 %v329, %v337
        %339 = vst [vmem:[%s233] sm:$0xff] %v338
        %s340 = sand.u32 %s121, 1
        %s341 = scalar_lea.sflag [#allocation4], %s340
        %s342 = sand.u32 %s121, 1
        %s343 = smul.addr %s342, 8
        %s344 = scalar_lea.vmem [#allocation7], %s343
        // Predicated region
        $region41: #{tpu_custom_call.1} parent=31 // pred_check
          %p345 = pneg %p131
        $region42: #{tpu_custom_call.1} parent=31 // pred_check_branch
          %347 = sbr.rel (%p345) target = $region44
        $region43: #{tpu_custom_call.1} parent=31 // pred_region
          %s349 = ssub.s32 128, 128
          %350 = vsyncadd %s341, %s349
          %s351 = sadd.s32 %s26, %s25
          %s352 = smul.addr %s351, 128
          %s353 = scalar_lea.hbm %s3, %s352
          %s355 = sshll.u32 %s344, 4
          %s356 = int_to_ptr.vmem [resolvable:$true] %s355
          %358 = dma.vmem_to_hbm [thread:$0]  %s356, 128, %s353, %s341
        $region44: #{tpu_custom_call.1} parent=31 // pred_fallthru
          _
      $region32: #{tpu_custom_call.1} parent=5 // pred_fallthru
        _
      %p359 = scmp.le.s32.totalorder 2, %s16
      // Predicated region
      $region45: #{tpu_custom_call.1} parent=5 // pred_check
        %p360 = pneg %p359
      $region46: #{tpu_custom_call.1} parent=5 // pred_check_branch
        %362 = sbr.rel (%p360) target = $region48
      $region47: #{tpu_custom_call.1} parent=5 // pred_region
        %s363 = ssub.s32 %s16, 2
        // Predicated region
        $region49: #{tpu_custom_call.1} parent=47 // pred_check
          %p364 = pneg %p137
        $region50: #{tpu_custom_call.1} parent=47 // pred_check_branch
          %366 = sbr.rel (%p364) target = $region52
        $region51: #{tpu_custom_call.1} parent=47 // pred_region
          %s367 = sand.u32 %s122, 1
          %s368 = scalar_lea.sflag [#allocation4], %s367
          %s369 = sand.u32 %s122, 1
          %s370 = smul.addr %s369, 8
          %s371 = scalar_lea.vmem [#allocation7], %s370
          %372 = dma.done %s368, 128
        $region52: #{tpu_custom_call.1} parent=47 // pred_fallthru
          _
      $region48: #{tpu_custom_call.1} parent=5 // pred_fallthru
        _
    $region6: #{tpu_custom_call.1} parent=1 // loop_footer
      %s20 = sadd.s32 1, %s16
    $region7: #{tpu_custom_call.1} parent=1 // loop_footer_branch
      %15 = sbr.rel target = $region3
    $region8: #{tpu_custom_call.1} parent=1 // loop_exit
      _
    %373 = vsyncpa [#allocation3], 1
    %s374 = scalar_lea.sflag [#allocation3], 1
    %375 = vsyncpa %s374, 1
    %376 = vsyncpa [#allocation6], 1
    %377 = vsyncpa [#allocation4], 1
    %s378 = scalar_lea.sflag [#allocation4], 1
    %379 = vsyncpa %s378, 1

</llo_original>
